<compile_context>
chip_gen: v6e
topology: v6e:2x2x1
jax: 0.10.0
libtpu: 0.0.40
codegen_flags: <defaults>
</compile_context>

<pallas_src>
import numpy as np
import jax
import jax.numpy as jnp
from jax.experimental import pallas as pl
from jax.experimental.pallas import tpu as pltpu

_ROW_STRIP = 128          # strip size over the i axis of the pairwise matrix
_LANE_TARGET = 512        # aim for roughly this many live lanes per grid step


def _far_kernel(p_ref, q_ref, o_ref):
    # p_ref: (1, 1, A_blk, n, 3)    points, original layout (i on sublanes, coord on lanes)
    # q_ref: (1, 1, 3, A_blk*n)     points packed on lanes  (coord on sublanes, (a, j) on lanes)
    # o_ref: (1, 1, 1, A_blk*n)     out[a*n + j] = max_i ||pc[a,j,:] - pc[a,i,:] + 1e-7||
    a_blk = p_ref.shape[2]
    n = p_ref.shape[3]
    ncoord = p_ref.shape[4]

    q = q_ref[0, 0, :, :]                                               # (3, A_blk*n)
    # pc[., j, c] + eps, one full-lane row per coordinate (hoisted out of the loops).
    rows = [q[c:c + 1, :] + jnp.float32(1e-7) for c in range(ncoord)]

    for a in range(a_blk):                                              # static unroll: clusters
        p_a = p_ref[0, 0, a, :, :]                                      # (n, 3)
        seg = slice(a * n, (a + 1) * n)
        rm = None                                                       # running max over i
        for i0 in range(0, n, _ROW_STRIP):                              # strip-mine i (sublanes)
            rs = min(_ROW_STRIP, n - i0)
            d2 = None
            for c in range(ncoord):                                     # static unroll: coords
                col = p_a[i0:i0 + rs, c:c + 1]                          # (rs, 1)  pc[a, i, c]
                diff = rows[c][:, seg] - col                            # (rs, n)  VPU broadcast
                sq = diff * diff
                d2 = sq if d2 is None else d2 + sq
            s = jnp.max(d2, axis=0, keepdims=True)                      # (1, n) max over strip i
            rm = s if rm is None else jnp.maximum(rm, s)
        o_ref[0, 0, :, seg] = jnp.sqrt(rm)                              # per-(cluster, j) dist


def farthest_dist(adv_pc, weights=None, batch_avg=True):
    """adv_pc: (B, num_add, cl_num_p, 3) float array (PyTorch layout)."""
    adv_pc = jnp.asarray(adv_pc, jnp.float32)
    b, num_add, n, ncoord = adv_pc.shape

    # Clusters per grid step: fill the lane axis up to ~_LANE_TARGET lanes per step.
    a_blk = max(1, min(num_add, _LANE_TARGET // max(n, 1)))
    g = -(-num_add // a_blk)                 # ceil-div
    a_pad = g * a_blk
    pc = adv_pc
    if a_pad != num_add:                     # pad with zero clusters; dropped before reduction
        pc = jnp.pad(pc, ((0, 0), (0, a_pad - num_add), (0, 0), (0, 0)))

    p = pc.reshape(b, g, a_blk, n, ncoord)                                   # (B,G,A,n,3)
    q = jnp.transpose(p, (0, 1, 4, 2, 3)).reshape(b, g, ncoord, a_blk * n)   # (B,G,3,A*n)
    lanes = a_blk * n

    per_j = pl.pallas_call(
        _far_kernel,
        out_shape=jax.ShapeDtypeStruct((b, g, 1, lanes), jnp.float32),
        grid=(b, g),
        in_specs=[
            pl.BlockSpec((1, 1, a_blk, n, ncoord), lambda i, j: (i, j, 0, 0, 0)),
            pl.BlockSpec((1, 1, ncoord, lanes), lambda i, j: (i, j, 0, 0)),
        ],
        out_specs=pl.BlockSpec((1, 1, 1, lanes), lambda i, j: (i, j, 0, 0)),
        compiler_params=pltpu.CompilerParams(
            dimension_semantics=("parallel", "parallel")),
    )(p, q)

    # Tiny wrapper-side epilogue: per-cluster max over j, cluster sum, weighting, batch mean.
    per_j = per_j.reshape(b, a_pad, n)[:, :num_add, :]      # (B, num_add, n)
    far = jnp.max(per_j, axis=-1)                           # (B, num_add)
    far_dist = jnp.sum(far, axis=1)                         # (B,)
    if weights is None:
        weights = jnp.ones((b,), jnp.float32)
    loss = far_dist * jnp.asarray(weights, jnp.float32)
    return jnp.mean(loss) if batch_avg else loss


# ----------------------------- pure-JAX reference -----------------------------
def _ref_farthest_dist(adv_pc, weights=None, batch_avg=True):
    adv_pc = jnp.asarray(adv_pc, jnp.float32)
    B = adv_pc.shape[0]
    if weights is None:
        weights = jnp.ones((B,), jnp.float32)
    delta = adv_pc[:, :, None, :, :] - adv_pc[:, :, :, None, :] + 1e-7
    norm = jnp.sqrt(jnp.sum(delta * delta, axis=-1))
    far = jnp.max(jnp.max(norm, axis=2), axis=2)
    far = jnp.sum(far, axis=1)
    loss = far * jnp.asarray(weights, jnp.float32)
    return jnp.mean(loss) if batch_avg else loss


if __name__ == "__main__":
    key = jax.random.PRNGKey(0)
    k1, k2 = jax.random.split(key)

    # Case 1: default (batch-averaged).
    B, NUM_ADD, CL_NUM_P = 2, 4, 16
    adv_pc = jax.random.normal(k1, (B, NUM_ADD, CL_NUM_P, 3), jnp.float32)
    out = jax.block_until_ready(farthest_dist(adv_pc))
    ref = jax.block_until_ready(_ref_farthest_dist(adv_pc))
    np.testing.assert_allclose(np.asarray(out), np.asarray(ref), rtol=1e-4, atol=1e-5)

    # Case 2: weighted, no batch averaging.
    w = jnp.arange(1, B + 1, dtype=jnp.float32)
    out_w = jax.block_until_ready(farthest_dist(adv_pc, weights=w, batch_avg=False))
    ref_w = jax.block_until_ready(_ref_farthest_dist(adv_pc, weights=w, batch_avg=False))
    np.testing.assert_allclose(np.asarray(out_w), np.asarray(ref_w), rtol=1e-4, atol=1e-5)

    # Case 3: different cluster size / odd num_add.
    adv_pc2 = jax.random.normal(k2, (2, 3, 32, 3), jnp.float32)
    out2 = jax.block_until_ready(farthest_dist(adv_pc2))
    ref2 = jax.block_until_ready(_ref_farthest_dist(adv_pc2))
    np.testing.assert_allclose(np.asarray(out2), np.asarray(ref2), rtol=1e-4, atol=1e-5)

    print("KERNEL_OK")
</pallas_src>

<mosaic_0001>
module attributes {stable_mosaic.version = 11 : i64} {
  func.func @_far_kernel(%arg0: i32, %arg1: i32, %arg2: memref<1x1x4x16x3xf32, #tpu.memory_space<vmem>>, %arg3: memref<1x1x3x64xf32, #tpu.memory_space<vmem>>, %arg4: memref<1x1x1x64xf32, #tpu.memory_space<vmem>>) attributes {dimension_semantics = [#tpu.dimension_semantics<parallel>, #tpu.dimension_semantics<parallel>], iteration_bounds = array<i64: 2, 1>, scalar_prefetch = 0 : i64, scratch_operands = 0 : i64, tpu.core_type = #tpu.core_type<tc>, window_params = [{transform_indices = @transform_0, window_bounds = array<i64: 1, 1, 4, 16, 3>}, {transform_indices = @transform_1, window_bounds = array<i64: 1, 1, 3, 64>}, {transform_indices = @transform_2, window_bounds = array<i64: 1, 1, 1, 64>}]} {
    %c0 = arith.constant 0 : index
    %c0_0 = arith.constant 0 : index
    %c0_1 = arith.constant 0 : index
    %c0_2 = arith.constant 0 : index
    %0 = vector.load %arg3[%c0, %c0_0, %c0_1, %c0_2] : memref<1x1x3x64xf32, #tpu.memory_space<vmem>>, vector<1x1x3x64xf32>
    %1 = vector.shape_cast %0 : vector<1x1x3x64xf32> to vector<3x64xf32>
    %2 = vector.extract_strided_slice %1 {offsets = [0, 0], sizes = [1, 64], strides = [1, 1]} : vector<3x64xf32> to vector<1x64xf32>
    %cst = arith.constant 1.000000e-07 : f32
    %3 = vector.broadcast %cst : f32 to vector<1x64xf32>
    %4 = arith.addf %2, %3 : vector<1x64xf32>
    %5 = vector.extract_strided_slice %1 {offsets = [1, 0], sizes = [1, 64], strides = [1, 1]} : vector<3x64xf32> to vector<1x64xf32>
    %cst_3 = arith.constant 1.000000e-07 : f32
    %6 = vector.broadcast %cst_3 : f32 to vector<1x64xf32>
    %7 = arith.addf %5, %6 : vector<1x64xf32>
    %8 = vector.extract_strided_slice %1 {offsets = [2, 0], sizes = [1, 64], strides = [1, 1]} : vector<3x64xf32> to vector<1x64xf32>
    %cst_4 = arith.constant 1.000000e-07 : f32
    %9 = vector.broadcast %cst_4 : f32 to vector<1x64xf32>
    %10 = arith.addf %8, %9 : vector<1x64xf32>
    %c0_5 = arith.constant 0 : index
    %c0_6 = arith.constant 0 : index
    %c0_7 = arith.constant 0 : index
    %c0_8 = arith.constant 0 : index
    %c0_9 = arith.constant 0 : index
    %11 = vector.load %arg2[%c0_5, %c0_6, %c0_7, %c0_8, %c0_9] : memref<1x1x4x16x3xf32, #tpu.memory_space<vmem>>, vector<1x1x1x16x3xf32>
    %12 = vector.shape_cast %11 : vector<1x1x1x16x3xf32> to vector<16x3xf32>
    %13 = vector.extract_strided_slice %12 {offsets = [0, 0], sizes = [16, 1], strides = [1, 1]} : vector<16x3xf32> to vector<16x1xf32>
    %14 = vector.extract_strided_slice %4 {offsets = [0, 0], sizes = [1, 16], strides = [1, 1]} : vector<1x64xf32> to vector<1x16xf32>
    %15 = vector.broadcast %14 : vector<1x16xf32> to vector<16x16xf32>
    %16 = vector.broadcast %13 : vector<16x1xf32> to vector<16x16xf32>
    %17 = arith.subf %15, %16 : vector<16x16xf32>
    %18 = arith.mulf %17, %17 : vector<16x16xf32>
    %19 = vector.extract_strided_slice %12 {offsets = [0, 1], sizes = [16, 1], strides = [1, 1]} : vector<16x3xf32> to vector<16x1xf32>
    %20 = vector.extract_strided_slice %7 {offsets = [0, 0], sizes = [1, 16], strides = [1, 1]} : vector<1x64xf32> to vector<1x16xf32>
    %21 = vector.broadcast %20 : vector<1x16xf32> to vector<16x16xf32>
    %22 = vector.broadcast %19 : vector<16x1xf32> to vector<16x16xf32>
    %23 = arith.subf %21, %22 : vector<16x16xf32>
    %24 = arith.mulf %23, %23 : vector<16x16xf32>
    %25 = arith.addf %18, %24 : vector<16x16xf32>
    %26 = vector.extract_strided_slice %12 {offsets = [0, 2], sizes = [16, 1], strides = [1, 1]} : vector<16x3xf32> to vector<16x1xf32>
    %27 = vector.extract_strided_slice %10 {offsets = [0, 0], sizes = [1, 16], strides = [1, 1]} : vector<1x64xf32> to vector<1x16xf32>
    %28 = vector.broadcast %27 : vector<1x16xf32> to vector<16x16xf32>
    %29 = vector.broadcast %26 : vector<16x1xf32> to vector<16x16xf32>
    %30 = arith.subf %28, %29 : vector<16x16xf32>
    %31 = arith.mulf %30, %30 : vector<16x16xf32>
    %32 = arith.addf %25, %31 : vector<16x16xf32>
    %cst_10 = arith.constant dense<0xFF800000> : vector<16xf32>
    %33 = vector.multi_reduction <maximumf>, %32, %cst_10 [0] : vector<16x16xf32> to vector<16xf32>
    %34 = vector.shape_cast %33 : vector<16xf32> to vector<1x16xf32>
    %35 = math.sqrt %34 : vector<1x16xf32>
    %c0_11 = arith.constant 0 : index
    %c0_12 = arith.constant 0 : index
    %c0_13 = arith.constant 0 : index
    %c0_14 = arith.constant 0 : index
    %36 = vector.load %arg4[%c0_11, %c0_12, %c0_13, %c0_14] : memref<1x1x1x64xf32, #tpu.memory_space<vmem>>, vector<1x1x1x16xf32>
    %37 = vector.shape_cast %36 : vector<1x1x1x16xf32> to vector<1x16xf32>
    %38 = vector.shape_cast %35 : vector<1x16xf32> to vector<1x1x1x16xf32>
    tpu.vector_store %arg4[%c0_11, %c0_12, %c0_13, %c0_14], %38 {strides = array<i32>} : memref<1x1x1x64xf32, #tpu.memory_space<vmem>>, vector<1x1x1x16xf32>,
    %c0_15 = arith.constant 0 : index
    %c0_16 = arith.constant 0 : index
    %c1 = arith.constant 1 : index
    %c0_17 = arith.constant 0 : index
    %c0_18 = arith.constant 0 : index
    %39 = vector.load %arg2[%c0_15, %c0_16, %c1, %c0_17, %c0_18] : memref<1x1x4x16x3xf32, #tpu.memory_space<vmem>>, vector<1x1x1x16x3xf32>
    %40 = vector.shape_cast %39 : vector<1x1x1x16x3xf32> to vector<16x3xf32>
    %41 = vector.extract_strided_slice %40 {offsets = [0, 0], sizes = [16, 1], strides = [1, 1]} : vector<16x3xf32> to vector<16x1xf32>
    %42 = vector.extract_strided_slice %4 {offsets = [0, 16], sizes = [1, 16], strides = [1, 1]} : vector<1x64xf32> to vector<1x16xf32>
    %43 = vector.broadcast %42 : vector<1x16xf32> to vector<16x16xf32>
    %44 = vector.broadcast %41 : vector<16x1xf32> to vector<16x16xf32>
    %45 = arith.subf %43, %44 : vector<16x16xf32>
    %46 = arith.mulf %45, %45 : vector<16x16xf32>
    %47 = vector.extract_strided_slice %40 {offsets = [0, 1], sizes = [16, 1], strides = [1, 1]} : vector<16x3xf32> to vector<16x1xf32>
    %48 = vector.extract_strided_slice %7 {offsets = [0, 16], sizes = [1, 16], strides = [1, 1]} : vector<1x64xf32> to vector<1x16xf32>
    %49 = vector.broadcast %48 : vector<1x16xf32> to vector<16x16xf32>
    %50 = vector.broadcast %47 : vector<16x1xf32> to vector<16x16xf32>
    %51 = arith.subf %49, %50 : vector<16x16xf32>
    %52 = arith.mulf %51, %51 : vector<16x16xf32>
    %53 = arith.addf %46, %52 : vector<16x16xf32>
    %54 = vector.extract_strided_slice %40 {offsets = [0, 2], sizes = [16, 1], strides = [1, 1]} : vector<16x3xf32> to vector<16x1xf32>
    %55 = vector.extract_strided_slice %10 {offsets = [0, 16], sizes = [1, 16], strides = [1, 1]} : vector<1x64xf32> to vector<1x16xf32>
    %56 = vector.broadcast %55 : vector<1x16xf32> to vector<16x16xf32>
    %57 = vector.broadcast %54 : vector<16x1xf32> to vector<16x16xf32>
    %58 = arith.subf %56, %57 : vector<16x16xf32>
    %59 = arith.mulf %58, %58 : vector<16x16xf32>
    %60 = arith.addf %53, %59 : vector<16x16xf32>
    %cst_19 = arith.constant dense<0xFF800000> : vector<16xf32>
    %61 = vector.multi_reduction <maximumf>, %60, %cst_19 [0] : vector<16x16xf32> to vector<16xf32>
    %62 = vector.shape_cast %61 : vector<16xf32> to vector<1x16xf32>
    %63 = math.sqrt %62 : vector<1x16xf32>
    %c0_20 = arith.constant 0 : index
    %c0_21 = arith.constant 0 : index
    %c0_22 = arith.constant 0 : index
    %c16 = arith.constant 16 : index
    %64 = vector.load %arg4[%c0_20, %c0_21, %c0_22, %c16] : memref<1x1x1x64xf32, #tpu.memory_space<vmem>>, vector<1x1x1x16xf32>
    %65 = vector.shape_cast %64 : vector<1x1x1x16xf32> to vector<1x16xf32>
    %66 = vector.shape_cast %63 : vector<1x16xf32> to vector<1x1x1x16xf32>
    tpu.vector_store %arg4[%c0_20, %c0_21, %c0_22, %c16], %66 {strides = array<i32>} : memref<1x1x1x64xf32, #tpu.memory_space<vmem>>, vector<1x1x1x16xf32>,
    %c0_23 = arith.constant 0 : index
    %c0_24 = arith.constant 0 : index
    %c2 = arith.constant 2 : index
    %c0_25 = arith.constant 0 : index
    %c0_26 = arith.constant 0 : index
    %67 = vector.load %arg2[%c0_23, %c0_24, %c2, %c0_25, %c0_26] : memref<1x1x4x16x3xf32, #tpu.memory_space<vmem>>, vector<1x1x1x16x3xf32>
    %68 = vector.shape_cast %67 : vector<1x1x1x16x3xf32> to vector<16x3xf32>
    %69 = vector.extract_strided_slice %68 {offsets = [0, 0], sizes = [16, 1], strides = [1, 1]} : vector<16x3xf32> to vector<16x1xf32>
    %70 = vector.extract_strided_slice %4 {offsets = [0, 32], sizes = [1, 16], strides = [1, 1]} : vector<1x64xf32> to vector<1x16xf32>
    %71 = vector.broadcast %70 : vector<1x16xf32> to vector<16x16xf32>
    %72 = vector.broadcast %69 : vector<16x1xf32> to vector<16x16xf32>
    %73 = arith.subf %71, %72 : vector<16x16xf32>
    %74 = arith.mulf %73, %73 : vector<16x16xf32>
    %75 = vector.extract_strided_slice %68 {offsets = [0, 1], sizes = [16, 1], strides = [1, 1]} : vector<16x3xf32> to vector<16x1xf32>
    %76 = vector.extract_strided_slice %7 {offsets = [0, 32], sizes = [1, 16], strides = [1, 1]} : vector<1x64xf32> to vector<1x16xf32>
    %77 = vector.broadcast %76 : vector<1x16xf32> to vector<16x16xf32>
    %78 = vector.broadcast %75 : vector<16x1xf32> to vector<16x16xf32>
    %79 = arith.subf %77, %78 : vector<16x16xf32>
    %80 = arith.mulf %79, %79 : vector<16x16xf32>
    %81 = arith.addf %74, %80 : vector<16x16xf32>
    %82 = vector.extract_strided_slice %68 {offsets = [0, 2], sizes = [16, 1], strides = [1, 1]} : vector<16x3xf32> to vector<16x1xf32>
    %83 = vector.extract_strided_slice %10 {offsets = [0, 32], sizes = [1, 16], strides = [1, 1]} : vector<1x64xf32> to vector<1x16xf32>
    %84 = vector.broadcast %83 : vector<1x16xf32> to vector<16x16xf32>
    %85 = vector.broadcast %82 : vector<16x1xf32> to vector<16x16xf32>
    %86 = arith.subf %84, %85 : vector<16x16xf32>
    %87 = arith.mulf %86, %86 : vector<16x16xf32>
    %88 = arith.addf %81, %87 : vector<16x16xf32>
    %cst_27 = arith.constant dense<0xFF800000> : vector<16xf32>
    %89 = vector.multi_reduction <maximumf>, %88, %cst_27 [0] : vector<16x16xf32> to vector<16xf32>
    %90 = vector.shape_cast %89 : vector<16xf32> to vector<1x16xf32>
    %91 = math.sqrt %90 : vector<1x16xf32>
    %c0_28 = arith.constant 0 : index
    %c0_29 = arith.constant 0 : index
    %c0_30 = arith.constant 0 : index
    %c32 = arith.constant 32 : index
    %92 = vector.load %arg4[%c0_28, %c0_29, %c0_30, %c32] : memref<1x1x1x64xf32, #tpu.memory_space<vmem>>, vector<1x1x1x16xf32>
    %93 = vector.shape_cast %92 : vector<1x1x1x16xf32> to vector<1x16xf32>
    %94 = vector.shape_cast %91 : vector<1x16xf32> to vector<1x1x1x16xf32>
    tpu.vector_store %arg4[%c0_28, %c0_29, %c0_30, %c32], %94 {strides = array<i32>} : memref<1x1x1x64xf32, #tpu.memory_space<vmem>>, vector<1x1x1x16xf32>,
    %c0_31 = arith.constant 0 : index
    %c0_32 = arith.constant 0 : index
    %c3 = arith.constant 3 : index
    %c0_33 = arith.constant 0 : index
    %c0_34 = arith.constant 0 : index
    %95 = vector.load %arg2[%c0_31, %c0_32, %c3, %c0_33, %c0_34] : memref<1x1x4x16x3xf32, #tpu.memory_space<vmem>>, vector<1x1x1x16x3xf32>
    %96 = vector.shape_cast %95 : vector<1x1x1x16x3xf32> to vector<16x3xf32>
    %97 = vector.extract_strided_slice %96 {offsets = [0, 0], sizes = [16, 1], strides = [1, 1]} : vector<16x3xf32> to vector<16x1xf32>
    %98 = vector.extract_strided_slice %4 {offsets = [0, 48], sizes = [1, 16], strides = [1, 1]} : vector<1x64xf32> to vector<1x16xf32>
    %99 = vector.broadcast %98 : vector<1x16xf32> to vector<16x16xf32>
    %100 = vector.broadcast %97 : vector<16x1xf32> to vector<16x16xf32>
    %101 = arith.subf %99, %100 : vector<16x16xf32>
    %102 = arith.mulf %101, %101 : vector<16x16xf32>
    %103 = vector.extract_strided_slice %96 {offsets = [0, 1], sizes = [16, 1], strides = [1, 1]} : vector<16x3xf32> to vector<16x1xf32>
    %104 = vector.extract_strided_slice %7 {offsets = [0, 48], sizes = [1, 16], strides = [1, 1]} : vector<1x64xf32> to vector<1x16xf32>
    %105 = vector.broadcast %104 : vector<1x16xf32> to vector<16x16xf32>
    %106 = vector.broadcast %103 : vector<16x1xf32> to vector<16x16xf32>
    %107 = arith.subf %105, %106 : vector<16x16xf32>
    %108 = arith.mulf %107, %107 : vector<16x16xf32>
    %109 = arith.addf %102, %108 : vector<16x16xf32>
    %110 = vector.extract_strided_slice %96 {offsets = [0, 2], sizes = [16, 1], strides = [1, 1]} : vector<16x3xf32> to vector<16x1xf32>
    %111 = vector.extract_strided_slice %10 {offsets = [0, 48], sizes = [1, 16], strides = [1, 1]} : vector<1x64xf32> to vector<1x16xf32>
    %112 = vector.broadcast %111 : vector<1x16xf32> to vector<16x16xf32>
    %113 = vector.broadcast %110 : vector<16x1xf32> to vector<16x16xf32>
    %114 = arith.subf %112, %113 : vector<16x16xf32>
    %115 = arith.mulf %114, %114 : vector<16x16xf32>
    %116 = arith.addf %109, %115 : vector<16x16xf32>
    %cst_35 = arith.constant dense<0xFF800000> : vector<16xf32>
    %117 = vector.multi_reduction <maximumf>, %116, %cst_35 [0] : vector<16x16xf32> to vector<16xf32>
    %118 = vector.shape_cast %117 : vector<16xf32> to vector<1x16xf32>
    %119 = math.sqrt %118 : vector<1x16xf32>
    %c0_36 = arith.constant 0 : index
    %c0_37 = arith.constant 0 : index
    %c0_38 = arith.constant 0 : index
    %c48 = arith.constant 48 : index
    %120 = vector.load %arg4[%c0_36, %c0_37, %c0_38, %c48] : memref<1x1x1x64xf32, #tpu.memory_space<vmem>>, vector<1x1x1x16xf32>
    %121 = vector.shape_cast %120 : vector<1x1x1x16xf32> to vector<1x16xf32>
    %122 = vector.shape_cast %119 : vector<1x16xf32> to vector<1x1x1x16xf32>
    tpu.vector_store %arg4[%c0_36, %c0_37, %c0_38, %c48], %122 {strides = array<i32>} : memref<1x1x1x64xf32, #tpu.memory_space<vmem>>, vector<1x1x1x16xf32>,
    return
  }
  func.func @transform_0(%arg0: i32, %arg1: i32) -> (i32, i32, i32, i32, i32) {
    %c0_i32 = arith.constant 0 : i32
    %c0_i32_0 = arith.constant 0 : i32
    %c0_i32_1 = arith.constant 0 : i32
    %c0_i32_2 = arith.constant 0 : i32
    return %arg0, %arg1, %c0_i32, %c0_i32_0, %c0_i32_1 : i32, i32, i32, i32, i32
  }
  func.func @transform_1(%arg0: i32, %arg1: i32) -> (i32, i32, i32, i32) {
    %c0_i32 = arith.constant 0 : i32
    %c0_i32_0 = arith.constant 0 : i32
    %c0_i32_1 = arith.constant 0 : i32
    return %arg0, %arg1, %c0_i32, %c0_i32_0 : i32, i32, i32, i32
  }
  func.func @transform_2(%arg0: i32, %arg1: i32) -> (i32, i32, i32, i32) {
    %c0_i32 = arith.constant 0 : i32
    %c0_i32_0 = arith.constant 0 : i32
    %c0_i32_1 = arith.constant 0 : i32
    return %arg0, %arg1, %c0_i32, %c0_i32_0 : i32, i32, i32, i32
  }
}

</mosaic_0001>

<llo_original>
// kernel: tpu_custom_call.1
$region0: #{tpu_custom_call.1}
  #allocation0 [shape = 'u32[]', space=smem, size = 0x4, offset = 0x4, fixed_abs, tag = 'smem constant byte address 0x4 - core index']
  #allocation1 [shape = 'u32[144,128]{1,0:T(1,128)}', space=vmem, size = 0x12000, scoped, tag = 'internal scratch']
  %s0 = inlined_call_operand.vmem [shape: f32[2,1,4,16,3], index: 0, kind: input, shape index: {}]
  %s1 = inlined_call_operand.vmem [shape: f32[2,1,3,64], index: 1, kind: input, shape index: {}]
  %s2 = inlined_call_operand.hbm [shape: f32[2,1,1,64], index: 2, kind: output, shape index: {}]
  %s3 = sld [smem:[#allocation0]]
  $region41: #{tpu_custom_call.1} parent=0
    _
  %s5 = ssub.s32 1, %s3
  %s6 = scalar_select 0, %s5, %s3
  $region1: #{tpu_custom_call.1} parent=0
    #allocation2 [shape = 'u8[1024]{0}', space=vmem, size = 0x400, scoped, tag = 'output window, operand 0']
    #allocation3 [shape = 's32[2]{0}', space=sflag, size = 0x8, scoped, tag = 'scoped memory for tpu_custom_call.1']
    %7 = vsyncpa [#allocation3], 0
    %s8 = scalar_lea.sflag [#allocation3], 1
    %9 = vsyncpa %s8, 0
    loop: start=0, step=1, limit=4
    $region2: #{tpu_custom_call.1} parent=1 // loop_pre_header
      _
    $region3: #{tpu_custom_call.1} parent=1 // loop_header
      %s11 = sphi 0, %s15
      %p12 = scmp.ge.s32.totalorder %s11, 4
      %s18 = sphi 0, %s30
      %s19 = sphi 0, %s26
      %s20 = sphi 0, %s18
      %s21 = sphi 0, %s19
      %s22 = sphi 0, %s20
      %s23 = sphi 0, %s21
      %s35 = sphi 0, %s37
      %s38 = sphi 0, %s35
      %s39 = sphi 0, %s38
      %s55 = sphi 0, %s39
      %s63 = sphi 0, %s65
      %s66 = sphi 0, %s63
      %s67 = sphi 0, %s66
      %s83 = sphi 0, %s67
      %s91 = sphi 0, %s93
      %s94 = sphi 0, %s91
      %s95 = sphi 0, %s94
      %s111 = sphi 0, %s95
    $region4: #{tpu_custom_call.1} parent=1 // loop_header_branch
      %14 = sbr.rel (%p12) target = $region8
    $region5: #{tpu_custom_call.1} parent=1 // loop_body
      %s16 = ssub.s32 %s11, 1
      %s17 = ssub.s32 %s11, 2
      %s24 = sadd.s32 1, %s19
      %p25 = scmp.ge.s32.totalorder %s24, 1
      %s26 = scalar_select %p25, 0, %s24
      %s27 = sadd.s32 1, %s18
      %s28 = scalar_select %p25, %s27, %s18
      %p29 = scmp.ge.s32.totalorder %s28, 2
      %s30 = scalar_select %p29, 0, %s28
      %s31 = ssub.s32 %s18, %s30
      %s32 = ssub.s32 %s19, %s26
      %s33 = sor.u32 %s31, %s32
      %p34 = scmp.eq.s32.totalorder %s33, 0
      %s36 = sadd.s32 %s35, 1
      %s37 = scalar_select %p34, %s35, %s36
      %p40 = pneg %p34
      %p41 = scmp.eq.s32.totalorder %s11, 1
      %p42 = por %p40, %p41
      %p43 = scmp.ne.s32.totalorder %s35, %s38
      %p44 = scmp.eq.s32.totalorder %s11, 0
      %p45 = por %p43, %p44
      %p46 = scmp.ne.s32.totalorder %s35, %s38
      %p47 = scmp.eq.s32.totalorder %s16, 1
      %p48 = por %p46, %p47
      %p49 = scmp.ne.s32.totalorder %s38, %s39
      %p50 = scmp.eq.s32.totalorder %s16, 0
      %p51 = por %p49, %p50
      %p52 = scmp.ne.s32.totalorder %s38, %s39
      %p53 = scmp.eq.s32.totalorder %s17, 1
      %p54 = por %p52, %p53
      %p56 = scmp.ne.s32.totalorder %s39, %s55
      %p57 = scmp.eq.s32.totalorder %s17, 0
      %p58 = por %p56, %p57
      %s59 = ssub.s32 %s18, %s30
      %s60 = ssub.s32 %s19, %s26
      %s61 = sor.u32 %s59, %s60
      %p62 = scmp.eq.s32.totalorder %s61, 0
      %s64 = sadd.s32 %s63, 1
      %s65 = scalar_select %p62, %s63, %s64
      %p68 = pneg %p62
      %p69 = scmp.eq.s32.totalorder %s11, 1
      %p70 = por %p68, %p69
      %p71 = scmp.ne.s32.totalorder %s63, %s66
      %p72 = scmp.eq.s32.totalorder %s11, 0
      %p73 = por %p71, %p72
      %p74 = scmp.ne.s32.totalorder %s63, %s66
      %p75 = scmp.eq.s32.totalorder %s16, 1
      %p76 = por %p74, %p75
      %p77 = scmp.ne.s32.totalorder %s66, %s67
      %p78 = scmp.eq.s32.totalorder %s16, 0
      %p79 = por %p77, %p78
      %p80 = scmp.ne.s32.totalorder %s66, %s67
      %p81 = scmp.eq.s32.totalorder %s17, 1
      %p82 = por %p80, %p81
      %p84 = scmp.ne.s32.totalorder %s67, %s83
      %p85 = scmp.eq.s32.totalorder %s17, 0
      %p86 = por %p84, %p85
      %s87 = ssub.s32 %s18, %s30
      %s88 = ssub.s32 %s19, %s26
      %s89 = sor.u32 %s87, %s88
      %p90 = scmp.eq.s32.totalorder %s89, 0
      %s92 = sadd.s32 %s91, 1
      %s93 = scalar_select %p90, %s91, %s92
      %p96 = pneg %p90
      %p97 = scmp.eq.s32.totalorder %s11, 1
      %p98 = por %p96, %p97
      %p99 = scmp.ne.s32.totalorder %s91, %s94
      %p100 = scmp.eq.s32.totalorder %s11, 0
      %p101 = por %p99, %p100
      %p102 = scmp.ne.s32.totalorder %s91, %s94
      %p103 = scmp.eq.s32.totalorder %s16, 1
      %p104 = por %p102, %p103
      %p105 = scmp.ne.s32.totalorder %s94, %s95
      %p106 = scmp.eq.s32.totalorder %s16, 0
      %p107 = por %p105, %p106
      %p108 = scmp.ne.s32.totalorder %s94, %s95
      %p109 = scmp.eq.s32.totalorder %s17, 1
      %p110 = por %p108, %p109
      %p112 = scmp.ne.s32.totalorder %s95, %s111
      %p113 = scmp.eq.s32.totalorder %s17, 0
      %p114 = por %p112, %p113
      %p115 = scmp.le.s32.totalorder 1, %s11
      %p116 = scmp.lt.s32.totalorder %s11, 3
      %p117 = pnand %p115, %p116
      %p118 = pneg %p117
      // Predicated region
      $region9: #{tpu_custom_call.1} parent=5 // pred_check
        _
      $region10: #{tpu_custom_call.1} parent=5 // pred_check_branch
        %120 = sbr.rel (%p117) target = $region12
      $region11: #{tpu_custom_call.1} parent=5 // pred_region
        %s121 = ssub.s32 %s11, 1
      $region12: #{tpu_custom_call.1} parent=5 // pred_fallthru
        _
      %p122 = scmp.lt.s32.totalorder %s11, 2
      // Predicated region
      $region13: #{tpu_custom_call.1} parent=5 // pred_check
        %p123 = pneg %p122
      $region14: #{tpu_custom_call.1} parent=5 // pred_check_branch
        %125 = sbr.rel (%p123) target = $region16
      $region15: #{tpu_custom_call.1} parent=5 // pred_region
        // Predicated region
        $region17: #{tpu_custom_call.1} parent=15 // pred_check
          %p126 = pneg %p45
        $region18: #{tpu_custom_call.1} parent=15 // pred_check_branch
          %128 = sbr.rel (%p126) target = $region20
        $region19: #{tpu_custom_call.1} parent=15 // pred_region
          %p129 = scmp.lt.s32.totalorder %s18, 1
          %s130 = scalar_select %p129, %s18, 1
          %p131 = scmp.lt.s32.totalorder %s19, 0
          %s132 = scalar_select %p131, %s19, 0
          %s133 = smul.addr %s132, 8
          %s134 = smul.addr %s130, 8
          %s135 = sadd.s32 %s133, %s134
          %s136 = smul.addr %s135, 8
          %s137 = scalar_lea.vmem %s0, %s136
        $region20: #{tpu_custom_call.1} parent=15 // pred_fallthru
          _
        // Predicated region
        $region21: #{tpu_custom_call.1} parent=15 // pred_check
          %p138 = pneg %p73
        $region22: #{tpu_custom_call.1} parent=15 // pred_check_branch
          %140 = sbr.rel (%p138) target = $region24
        $region23: #{tpu_custom_call.1} parent=15 // pred_region
          %p141 = scmp.lt.s32.totalorder %s18, 1
          %s142 = scalar_select %p141, %s18, 1
          %p143 = scmp.lt.s32.totalorder %s19, 0
          %s144 = scalar_select %p143, %s19, 0
          %s145 = sadd.s32 %s144, %s142
          %s146 = smul.addr %s145, 4
          %s147 = scalar_lea.vmem %s1, %s146
        $region24: #{tpu_custom_call.1} parent=15 // pred_fallthru
          _
      $region16: #{tpu_custom_call.1} parent=5 // pred_fallthru
        _
      %p148 = scmp.le.s32.totalorder 1, %s11
      %p149 = scmp.lt.s32.totalorder %s11, 3
      %p150 = pnand %p148, %p149
      %p151 = pneg %p150
      // Predicated region
      $region25: #{tpu_custom_call.1} parent=5 // pred_check
        _
      $region26: #{tpu_custom_call.1} parent=5 // pred_check_branch
        %153 = sbr.rel (%p150) target = $region28
      $region27: #{tpu_custom_call.1} parent=5 // pred_region
        %s154 = ssub.s32 %s11, 1
        %p155 = scmp.lt.s32.totalorder %s20, 1
        %s156 = scalar_select %p155, %s20, 1
        %p157 = scmp.lt.s32.totalorder %s21, 0
        %s158 = scalar_select %p157, %s21, 0
        %s159 = smul.addr %s158, 8
        %s160 = smul.addr %s156, 8
        %s161 = sadd.s32 %s159, %s160
        %s162 = smul.addr %s161, 8
        %s163 = scalar_lea.vmem %s0, %s162
        %p164 = pneg %p51
        %p165 = pneg %p48
        %p166 = scmp.lt.s32.totalorder %s20, 1
        %s167 = scalar_select %p166, %s20, 1
        %p168 = scmp.lt.s32.totalorder %s21, 0
        %s169 = scalar_select %p168, %s21, 0
        %s170 = sadd.s32 %s169, %s167
        %s171 = smul.addr %s170, 4
        %s172 = scalar_lea.vmem %s1, %s171
        %p173 = pneg %p79
        %p174 = pneg %p76
        %p175 = pneg %p107
        %p176 = pneg %p104
        %s177 = sand.u32 %s94, 1
        %s178 = scalar_lea.sflag [#allocation3], %s177
        %s179 = sand.u32 %s94, 1
        %s180 = scalar_lea.vmem [#allocation2], %s179
        %p181 = scmp.lt.s32.totalorder %s20, 1
        %s182 = scalar_select %p181, %s20, 1
        %p183 = scmp.lt.s32.totalorder %s21, 0
        %s184 = scalar_select %p183, %s21, 0
        %s185 = smul.addr %s184, 8
        %s186 = smul.addr %s182, 8
        %s187 = sadd.s32 %s185, %s186
        %s188 = smul.addr %s187, 8
        %s189 = scalar_lea.vmem %s0, %s188
        %p190 = scmp.lt.s32.totalorder %s20, 1
        %s191 = scalar_select %p190, %s20, 1
        %p192 = scmp.lt.s32.totalorder %s21, 0
        %s193 = scalar_select %p192, %s21, 0
        %s194 = sadd.s32 %s193, %s191
        %s195 = smul.addr %s194, 4
        %s196 = scalar_lea.vmem %s1, %s195
        %v197 = vld [vmem:[%s196] sm:$0x7]
        %v198 = vadd.f32 %v197, 1e-07
        %v199 = vld [vmem:[%s189] sm:$0xff]
        %v200 = vld [vmem:[%s189 + $0x8] sm:$0xff]
        %v201 = vlaneseq
        %v202 = vshrl.u32 %v201, 7
        %v203 = vsub.s32 0, %v202
        %v204 = vrot.slane %v198, %v203
        %206 = vset.pattern.permute.xlu0 0
        %207 = vperm.xlu0 %206, %v199
        %v208 = vpop.permute.xlu0 %207
        %211 = vset.pattern.permute.xlu0 0
        %212 = vperm.xlu0 %211, %v200
        %v213 = vpop.permute.xlu0 %212
        %v215 = vsub.f32 %v204, %v208
        %v216 = vsub.f32 %v204, %v213
        %v217 = vmul.f32 %v215, %v215
        %v218 = vmul.f32 %v216, %v216
        %v219 = vlaneseq
        %v220 = vshrl.u32 %v219, 7
        %v221 = vsub.s32 1, %v220
        %v222 = vrot.slane %v198, %v221
        %223 = vset.pattern.permute.xlu0 1
        %224 = vperm.xlu0 %223, %v199
        %v225 = vpop.permute.xlu0 %224
        %227 = vset.pattern.permute.xlu0 1
        %228 = vperm.xlu0 %227, %v200
        %v229 = vpop.permute.xlu0 %228
        %v231 = vsub.f32 %v222, %v225
        %v232 = vsub.f32 %v222, %v229
        %v233 = vmul.f32 %v231, %v231
        %v234 = vmul.f32 %v232, %v232
        %v235 = vadd.f32 %v217, %v233
        %v236 = vadd.f32 %v218, %v234
        %v237 = vlaneseq
        %v238 = vshrl.u32 %v237, 7
        %v239 = vsub.s32 2, %v238
        %v240 = vrot.slane %v198, %v239
        %241 = vset.pattern.permute.xlu0 2
        %242 = vperm.xlu0 %241, %v199
        %v243 = vpop.permute.xlu0 %242
        %245 = vset.pattern.permute.xlu0 2
        %246 = vperm.xlu0 %245, %v200
        %v247 = vpop.permute.xlu0 %246
        %v249 = vsub.f32 %v240, %v243
        %v250 = vsub.f32 %v240, %v247
        %v251 = vmul.f32 %v249, %v249
        %v252 = vmul.f32 %v250, %v250
        %v253 = vadd.f32 %v235, %v251
        %v254 = vadd.f32 %v236, %v252
        %vm255 = vcmask 130048
        %v256 = vsel %vm255, %v253, -inf
        %v257 = vsel %vm255, %v254, -inf
        %v258 = vmax.f32 %v256, %v257
        %v259 = vrot.slane %v258, 4
        %v260 = vmax.f32 %v258, %v259
        %v261 = vrot.slane %v260, 2
        %v262 = vmax.f32 %v260, %v261
        %v263 = vrot.slane %v262, 1
        %v264 = vmax.f32 %v262, %v263
        %v265 = vrsqrt.pop %v264
        %v266 = vmul.f32 %v264, %v265
        %vm267 = vcmp.eq.f32.partialorder %v264, inf
        %v268 = vsel %vm267, %v264, %v266
        %vm269 = vcmp.eq.f32.partialorder %v264, 0.0
        %v270 = vand.u32 %v264, 2147483648
        %v271 = vsel %vm269, %v270, %v268
        %vm272 = vcmask 122880
        %273 = vst.msk [vmem:[%s180] sm:$0x1] %vm272, %v271
        %s274 = scalar_lea.vmem %s189, 16
        %v275 = vld [vmem:[%s274] sm:$0xff]
        %v276 = vld [vmem:[%s274 + $0x8] sm:$0xff]
        %278 = vset.pattern.permute.xlu0 0
        %279 = vperm.xlu0 %278, %v275
        %v280 = vpop.permute.xlu0 %279
        %283 = vset.pattern.permute.xlu0 0
        %284 = vperm.xlu0 %283, %v276
        %v285 = vpop.permute.xlu0 %284
        %v287 = vsub.f32 %v204, %v280
        %v288 = vsub.f32 %v204, %v285
        %v289 = vmul.f32 %v287, %v287
        %v290 = vmul.f32 %v288, %v288
        %291 = vset.pattern.permute.xlu0 1
        %292 = vperm.xlu0 %291, %v275
        %v293 = vpop.permute.xlu0 %292
        %295 = vset.pattern.permute.xlu0 1
        %296 = vperm.xlu0 %295, %v276
        %v297 = vpop.permute.xlu0 %296
        %v299 = vsub.f32 %v222, %v293
        %v300 = vsub.f32 %v222, %v297
        %v301 = vmul.f32 %v299, %v299
        %v302 = vmul.f32 %v300, %v300
        %v303 = vadd.f32 %v289, %v301
        %v304 = vadd.f32 %v290, %v302
        %305 = vset.pattern.permute.xlu0 2
        %306 = vperm.xlu0 %305, %v275
        %v307 = vpop.permute.xlu0 %306
        %309 = vset.pattern.permute.xlu0 2
        %310 = vperm.xlu0 %309, %v276
        %v311 = vpop.permute.xlu0 %310
        %v313 = vsub.f32 %v240, %v307
        %v314 = vsub.f32 %v240, %v311
        %v315 = vmul.f32 %v313, %v313
        %v316 = vmul.f32 %v314, %v314
        %v317 = vadd.f32 %v303, %v315
        %v318 = vadd.f32 %v304, %v316
        %vm319 = vcmask 261248
        %v320 = vsel %vm319, %v317, -inf
        %v321 = vsel %vm319, %v318, -inf
        %v322 = vmax.f32 %v320, %v321
        %v323 = vrot.slane %v322, 4
        %v324 = vmax.f32 %v322, %v323
        %v325 = vrot.slane %v324, 2
        %v326 = vmax.f32 %v324, %v325
        %v327 = vrot.slane %v326, 1
        %v328 = vmax.f32 %v326, %v327
        %v329 = vrsqrt.pop %v328
        %v330 = vmul.f32 %v328, %v329
        %vm331 = vcmp.eq.f32.partialorder %v328, inf
        %v332 = vsel %vm331, %v328, %v330
        %vm333 = vcmp.eq.f32.partialorder %v328, 0.0
        %v334 = vand.u32 %v328, 2147483648
        %v335 = vsel %vm333, %v334, %v332
        %vm336 = vcmask 254080
        %337 = vst.msk [vmem:[%s180] sm:$0x1] %vm336, %v335
        %s338 = scalar_lea.vmem %s189, 32
        %v339 = vld [vmem:[%s338] sm:$0xff]
        %v340 = vld [vmem:[%s338 + $0x8] sm:$0xff]
        %342 = vset.pattern.permute.xlu0 0
        %343 = vperm.xlu0 %342, %v339
        %v344 = vpop.permute.xlu0 %343
        %347 = vset.pattern.permute.xlu0 0
        %348 = vperm.xlu0 %347, %v340
        %v349 = vpop.permute.xlu0 %348
        %v351 = vsub.f32 %v204, %v344
        %v352 = vsub.f32 %v204, %v349
        %v353 = vmul.f32 %v351, %v351
        %v354 = vmul.f32 %v352, %v352
        %355 = vset.pattern.permute.xlu0 1
        %356 = vperm.xlu0 %355, %v339
        %v357 = vpop.permute.xlu0 %356
        %359 = vset.pattern.permute.xlu0 1
        %360 = vperm.xlu0 %359, %v340
        %v361 = vpop.permute.xlu0 %360
        %v363 = vsub.f32 %v222, %v357
        %v364 = vsub.f32 %v222, %v361
        %v365 = vmul.f32 %v363, %v363
        %v366 = vmul.f32 %v364, %v364
        %v367 = vadd.f32 %v353, %v365
        %v368 = vadd.f32 %v354, %v366
        %369 = vset.pattern.permute.xlu0 2
        %370 = vperm.xlu0 %369, %v339
        %v371 = vpop.permute.xlu0 %370
        %373 = vset.pattern.permute.xlu0 2
        %374 = vperm.xlu0 %373, %v340
        %v375 = vpop.permute.xlu0 %374
        %v377 = vsub.f32 %v240, %v371
        %v378 = vsub.f32 %v240, %v375
        %v379 = vmul.f32 %v377, %v377
        %v380 = vmul.f32 %v378, %v378
        %v381 = vadd.f32 %v367, %v379
        %v382 = vadd.f32 %v368, %v380
        %vm383 = vcmask 392448
        %v384 = vsel %vm383, %v381, -inf
        %v385 = vsel %vm383, %v382, -inf
        %v386 = vmax.f32 %v384, %v385
        %v387 = vrot.slane %v386, 4
        %v388 = vmax.f32 %v386, %v387
        %v389 = vrot.slane %v388, 2
        %v390 = vmax.f32 %v388, %v389
        %v391 = vrot.slane %v390, 1
        %v392 = vmax.f32 %v390, %v391
        %v393 = vrsqrt.pop %v392
        %v394 = vmul.f32 %v392, %v393
        %vm395 = vcmp.eq.f32.partialorder %v392, inf
        %v396 = vsel %vm395, %v392, %v394
        %vm397 = vcmp.eq.f32.partialorder %v392, 0.0
        %v398 = vand.u32 %v392, 2147483648
        %v399 = vsel %vm397, %v398, %v396
        %vm400 = vcmask 385280
        %401 = vst.msk [vmem:[%s180] sm:$0x1] %vm400, %v399
        %s402 = scalar_lea.vmem %s189, 48
        %v403 = vld [vmem:[%s402] sm:$0xff]
        %v404 = vld [vmem:[%s402 + $0x8] sm:$0xff]
        %406 = vset.pattern.permute.xlu0 0
        %407 = vperm.xlu0 %406, %v403
        %v408 = vpop.permute.xlu0 %407
        %411 = vset.pattern.permute.xlu0 0
        %412 = vperm.xlu0 %411, %v404
        %v413 = vpop.permute.xlu0 %412
        %v415 = vsub.f32 %v204, %v408
        %v416 = vsub.f32 %v204, %v413
        %v417 = vmul.f32 %v415, %v415
        %v418 = vmul.f32 %v416, %v416
        %419 = vset.pattern.permute.xlu0 1
        %420 = vperm.xlu0 %419, %v403
        %v421 = vpop.permute.xlu0 %420
        %423 = vset.pattern.permute.xlu0 1
        %424 = vperm.xlu0 %423, %v404
        %v425 = vpop.permute.xlu0 %424
        %v427 = vsub.f32 %v222, %v421
        %v428 = vsub.f32 %v222, %v425
        %v429 = vmul.f32 %v427, %v427
        %v430 = vmul.f32 %v428, %v428
        %v431 = vadd.f32 %v417, %v429
        %v432 = vadd.f32 %v418, %v430
        %433 = vset.pattern.permute.xlu0 2
        %434 = vperm.xlu0 %433, %v403
        %v435 = vpop.permute.xlu0 %434
        %437 = vset.pattern.permute.xlu0 2
        %438 = vperm.xlu0 %437, %v404
        %v439 = vpop.permute.xlu0 %438
        %v441 = vsub.f32 %v240, %v435
        %v442 = vsub.f32 %v240, %v439
        %v443 = vmul.f32 %v441, %v441
        %v444 = vmul.f32 %v442, %v442
        %v445 = vadd.f32 %v431, %v443
        %v446 = vadd.f32 %v432, %v444
        %vm447 = vcmask 523648
        %v448 = vsel %vm447, %v445, -inf
        %v449 = vsel %vm447, %v446, -inf
        %v450 = vmax.f32 %v448, %v449
        %v451 = vrot.slane %v450, 4
        %v452 = vmax.f32 %v450, %v451
        %v453 = vrot.slane %v452, 2
        %v454 = vmax.f32 %v452, %v453
        %v455 = vrot.slane %v454, 1
        %v456 = vmax.f32 %v454, %v455
        %v457 = vrsqrt.pop %v456
        %v458 = vmul.f32 %v456, %v457
        %vm459 = vcmp.eq.f32.partialorder %v456, inf
        %v460 = vsel %vm459, %v456, %v458
        %vm461 = vcmp.eq.f32.partialorder %v456, 0.0
        %v462 = vand.u32 %v456, 2147483648
        %v463 = vsel %vm461, %v462, %v460
        %vm464 = vcmask 516480
        %465 = vst.msk [vmem:[%s180] sm:$0x1] %vm464, %v463
        %s466 = sand.u32 %s94, 1
        %s467 = scalar_lea.sflag [#allocation3], %s466
        %s468 = sand.u32 %s94, 1
        %s469 = scalar_lea.vmem [#allocation2], %s468
        // Predicated region
        $region29: #{tpu_custom_call.1} parent=27 // pred_check
          %p470 = pneg %p104
        $region30: #{tpu_custom_call.1} parent=27 // pred_check_branch
          %472 = sbr.rel (%p470) target = $region32
        $region31: #{tpu_custom_call.1} parent=27 // pred_region
          %s474 = ssub.s32 16, 16
          %475 = vsyncadd %s467, %s474
          %s476 = sadd.s32 %s21, %s20
          %s477 = smul.addr %s476, 16
          %s478 = scalar_lea.hbm %s2, %s477
          %s480 = sshll.u32 %s469, 4
          %s481 = int_to_ptr.vmem [resolvable:$true] %s480
          %483 = dma.vmem_to_hbm [thread:$0]  %s481, 16, %s478, %s467
        $region32: #{tpu_custom_call.1} parent=27 // pred_fallthru
          _
      $region28: #{tpu_custom_call.1} parent=5 // pred_fallthru
        _
      %p484 = scmp.le.s32.totalorder 2, %s11
      // Predicated region
      $region33: #{tpu_custom_call.1} parent=5 // pred_check
        %p485 = pneg %p484
      $region34: #{tpu_custom_call.1} parent=5 // pred_check_branch
        %487 = sbr.rel (%p485) target = $region36
      $region35: #{tpu_custom_call.1} parent=5 // pred_region
        %s488 = ssub.s32 %s11, 2
        // Predicated region
        $region37: #{tpu_custom_call.1} parent=35 // pred_check
          %p489 = pneg %p110
        $region38: #{tpu_custom_call.1} parent=35 // pred_check_branch
          %491 = sbr.rel (%p489) target = $region40
        $region39: #{tpu_custom_call.1} parent=35 // pred_region
          %s492 = sand.u32 %s95, 1
          %s493 = scalar_lea.sflag [#allocation3], %s492
          %s494 = sand.u32 %s95, 1
          %s495 = scalar_lea.vmem [#allocation2], %s494
          %496 = dma.done %s493, 16
        $region40: #{tpu_custom_call.1} parent=35 // pred_fallthru
          _
      $region36: #{tpu_custom_call.1} parent=5 // pred_fallthru
        _
    $region6: #{tpu_custom_call.1} parent=1 // loop_footer
      %s15 = sadd.s32 1, %s11
    $region7: #{tpu_custom_call.1} parent=1 // loop_footer_branch
      %10 = sbr.rel target = $region3
    $region8: #{tpu_custom_call.1} parent=1 // loop_exit
      _
    %497 = vsyncpa [#allocation3], 1
    %s498 = scalar_lea.sflag [#allocation3], 1
    %499 = vsyncpa %s498, 1

</llo_original>
